<compile_context>
chip_gen: v7x
topology: tpu7x:2x2x1
jax: 0.10.0
libtpu: 0.0.40
codegen_flags: <defaults>
</compile_context>

<pallas_src>
import jax
import jax.numpy as jnp
from jax.experimental import pallas as pl
from jax.experimental.pallas import tpu as pltpu

LANE = 128


def _make_kernel(rows, tile_rows, tiles_per_chunk, last_block, need_mask):
    groups = tile_rows // 8

    def _partial(lw):
        # (tile_rows,128) -> (groups,8,128), reduce the leading axis:
        # vreg-aligned VPU adds only, no cross-lane (XLU) work.
        return jnp.sum(lw.reshape(groups, 8, LANE), axis=0)

    def kernel(pred_ref, tgt_ref, w_ref, out_ref):
        p = pl.program_id(0)
        t = pl.program_id(1)

        @pl.when(t == 0)
        def _():
            out_ref[...] = jnp.zeros_like(out_ref)

        x = pred_ref[...].astype(jnp.float32)
        tgt = tgt_ref[...].astype(jnp.float32)
        w = w_ref[...].astype(jnp.float32)

        # BCEWithLogitsLoss(reduction='none'), numerically stable form:
        #   loss = max(x, 0) - x*t + log(1 + exp(-|x|))
        loss = jnp.maximum(x, 0.0) - x * tgt + jnp.log1p(jnp.exp(-jnp.abs(x)))
        lw = loss * w

        if need_mask:
            blk = p * tiles_per_chunk + t

            @pl.when(blk < last_block)
            def _():
                # Full tiles: unmasked accumulate (hot path).
                out_ref[...] += _partial(lw)

            @pl.when(blk >= last_block)
            def _():
                # Tail tile and any clamped out-of-range grid steps: zero the
                # rows past the true row count so padded garbage (even
                # NaN/inf) cannot propagate.
                row_ids = blk * tile_rows + jax.lax.broadcasted_iota(
                    jnp.int32, (tile_rows, LANE), 0)
                out_ref[...] += _partial(jnp.where(row_ids < rows, lw, 0.0))
        else:
            out_ref[...] += _partial(lw)

    return kernel


def weighted_bce_loss(predictions, targets, weights, *, tile_rows=None,
                      num_parallel=1, core_parallel=False):
    """Mean of elementwise BCE-with-logits(predictions, targets) * weights.

    num_parallel / core_parallel: on v7x set num_parallel=2 (and optionally
    core_parallel=True, which uses pltpu.CORE_PARALLEL for the leading grid
    axis) to shard the reduction across both TensorCores.  Defaults target
    single-TC chips (v5e / v6e).
    """
    assert predictions.shape == targets.shape == weights.shape
    total = predictions.size
    assert total % LANE == 0, "example sized so total elements divide 128"
    rows = total // LANE

    # Lane-dense 2D slabs in native dtype (no upcast, no padding copies).
    p2 = predictions.reshape(rows, LANE)
    t2 = targets.reshape(rows, LANE)
    w2 = weights.reshape(rows, LANE)
    arrays = (p2, t2, w2)

    # Sublane multiple required by the narrowest input dtype
    # (f32 -> 8, bf16 -> 16, int8 -> 32 rows).
    sub = max(32 // jnp.dtype(a.dtype).itemsize for a in arrays)

    # Tile size: keep 3 double-buffered input tiles under ~24 MiB so the
    # same config fits v7x's 64 MiB physical VMEM; this is ~8192 rows for
    # three f32 inputs (4 MiB per input tile).
    bytes_per_row = sum(jnp.dtype(a.dtype).itemsize for a in arrays) * LANE
    if tile_rows is None:
        tile_rows = (24 << 20) // (2 * bytes_per_row)
    tile_rows = max(sub, (tile_rows // sub) * sub)
    tile_rows = min(tile_rows, pl.cdiv(rows, sub) * sub)

    tiles_total = pl.cdiv(rows, tile_rows)
    num_parallel = max(1, min(num_parallel, tiles_total))
    tiles_per_chunk = pl.cdiv(tiles_total, num_parallel)
    covered_rows = num_parallel * tiles_per_chunk * tile_rows
    need_mask = covered_rows != rows
    last_block = tiles_total - 1

    def in_map(p, t):
        blk = p * tiles_per_chunk + t
        # Clamp so fully-out-of-range grid steps re-read the last valid
        # block; their contribution is zeroed by the in-kernel tail mask.
        return (jnp.minimum(blk, last_block), 0)

    in_spec = pl.BlockSpec((tile_rows, LANE), in_map)

    # Raise scoped VMEM so the big tiles also fit v5e's 16 MiB default;
    # capped well under v7x's 64 MiB physical VMEM.
    needed = 2 * bytes_per_row * tile_rows
    vmem_limit = int(min(max(32 << 20, needed + (4 << 20)), 56 << 20))

    sem0 = pltpu.CORE_PARALLEL if core_parallel else "parallel"

    partials = pl.pallas_call(
        _make_kernel(rows, tile_rows, tiles_per_chunk, last_block, need_mask),
        out_shape=jax.ShapeDtypeStruct((num_parallel * 8, LANE), jnp.float32),
        grid_spec=pltpu.PrefetchScalarGridSpec(
            num_scalar_prefetch=0,
            grid=(num_parallel, tiles_per_chunk),
            in_specs=[in_spec, in_spec, in_spec],
            out_specs=pl.BlockSpec((8, LANE), lambda p, t: (p, 0)),
        ),
        compiler_params=pltpu.CompilerParams(
            dimension_semantics=(sem0, "arbitrary"),
            vmem_limit_bytes=vmem_limit,
        ),
    )(p2, t2, w2)

    # Tiny cross-lane finish + mean in XLA (kernel stores stay lane-dense).
    # TODO(synk): for tiny inputs (<~1 MiB) a pure-XLA fallback would skip the
    # fixed pallas_call cost; kept on the kernel path here so it is exercised.
    return jnp.sum(partials, dtype=jnp.float32) / total


def _reference(predictions, targets, weights):
    x = predictions.astype(jnp.float32)
    t = targets.astype(jnp.float32)
    w = weights.astype(jnp.float32)
    loss = jnp.maximum(x, 0.0) - x * t + jnp.log1p(jnp.exp(-jnp.abs(x)))
    return jnp.mean(loss * w)


if __name__ == "__main__":
    key = jax.random.PRNGKey(0)
    k1, k2, k3 = jax.random.split(key, 3)

    # NCHW-shaped example inputs (batch=2, channels=4, spatial=16x16).
    shape = (2, 4, 16, 16)
    predictions = jax.random.normal(k1, shape, dtype=jnp.float32)
    targets = jax.random.bernoulli(k2, 0.5, shape).astype(jnp.float32)
    weights = jax.random.uniform(k3, shape, dtype=jnp.float32)

    out = weighted_bce_loss(predictions, targets, weights)
    out = jax.block_until_ready(out)

    ref = _reference(predictions, targets, weights)
    assert jnp.allclose(out, ref, rtol=1e-5, atol=1e-6), (out, ref)

    print("KERNEL_OK")
</pallas_src>

<mosaic_0001>
module attributes {stable_mosaic.version = 11 : i64} {
  func.func @kernel(%arg0: i32, %arg1: i32, %arg2: memref<16x128xf32, #tpu.memory_space<vmem>>, %arg3: memref<16x128xf32, #tpu.memory_space<vmem>>, %arg4: memref<16x128xf32, #tpu.memory_space<vmem>>, %arg5: memref<8x128xf32, #tpu.memory_space<vmem>>) attributes {dimension_semantics = [#tpu.dimension_semantics<parallel>, #tpu.dimension_semantics<arbitrary>], iteration_bounds = array<i64: 1, 1>, scalar_prefetch = 0 : i64, scratch_operands = 0 : i64, tpu.core_type = #tpu.core_type<tc>, window_params = [{transform_indices = @transform_0, window_bounds = array<i64: 16, 128>}, {transform_indices = @transform_1, window_bounds = array<i64: 16, 128>}, {transform_indices = @transform_2, window_bounds = array<i64: 16, 128>}, {transform_indices = @transform_3, window_bounds = array<i64: 8, 128>}]} {
    %c0_i32 = arith.constant 0 : i32
    %0 = arith.cmpi eq, %arg1, %c0_i32 : i32
    %1 = arith.extui %0 : i1 to i32
    %c0_i32_0 = arith.constant 0 : i32
    %2 = arith.cmpi ne, %1, %c0_i32_0 : i32
    scf.if %2 {
      %cst_12 = arith.constant 0.000000e+00 : f32
      %22 = vector.broadcast %cst_12 : f32 to vector<8x128xf32>
      %c0_13 = arith.constant 0 : index
      %c0_14 = arith.constant 0 : index
      %23 = vector.load %arg5[%c0_13, %c0_14] : memref<8x128xf32, #tpu.memory_space<vmem>>, vector<8x128xf32>
      tpu.vector_store %arg5[%c0_13, %c0_14], %22 {strides = array<i32>} : memref<8x128xf32, #tpu.memory_space<vmem>>, vector<8x128xf32>,
    } else {
    }
    %c0 = arith.constant 0 : index
    %c0_1 = arith.constant 0 : index
    %3 = vector.load %arg2[%c0, %c0_1] : memref<16x128xf32, #tpu.memory_space<vmem>>, vector<16x128xf32>
    %c0_2 = arith.constant 0 : index
    %c0_3 = arith.constant 0 : index
    %4 = vector.load %arg3[%c0_2, %c0_3] : memref<16x128xf32, #tpu.memory_space<vmem>>, vector<16x128xf32>
    %c0_4 = arith.constant 0 : index
    %c0_5 = arith.constant 0 : index
    %5 = vector.load %arg4[%c0_4, %c0_5] : memref<16x128xf32, #tpu.memory_space<vmem>>, vector<16x128xf32>
    %cst = arith.constant 0.000000e+00 : f32
    %6 = vector.broadcast %cst : f32 to vector<16x128xf32>
    %7 = arith.maximumf %3, %6 : vector<16x128xf32>
    %8 = arith.mulf %3, %4 : vector<16x128xf32>
    %9 = arith.subf %7, %8 : vector<16x128xf32>
    %10 = math.absf %3 : vector<16x128xf32>
    %cst_6 = arith.constant 0.000000e+00 : f32
    %11 = vector.broadcast %cst_6 : f32 to vector<16x128xf32>
    %12 = arith.subf %11, %10 : vector<16x128xf32>
    %13 = math.exp %12 : vector<16x128xf32>
    %14 = math.log1p %13 : vector<16x128xf32>
    %15 = arith.addf %9, %14 : vector<16x128xf32>
    %16 = arith.mulf %15, %5 : vector<16x128xf32>
    %c0_7 = arith.constant 0 : index
    %c0_8 = arith.constant 0 : index
    %17 = vector.load %arg5[%c0_7, %c0_8] : memref<8x128xf32, #tpu.memory_space<vmem>>, vector<8x128xf32>
    %18 = vector.shape_cast %16 : vector<16x128xf32> to vector<2x8x128xf32>
    %cst_9 = arith.constant dense<0.000000e+00> : vector<8x128xf32>
    %19 = vector.multi_reduction <add>, %18, %cst_9 [0] : vector<2x8x128xf32> to vector<8x128xf32>
    %20 = arith.addf %17, %19 : vector<8x128xf32>
    %c0_10 = arith.constant 0 : index
    %c0_11 = arith.constant 0 : index
    %21 = vector.load %arg5[%c0_10, %c0_11] : memref<8x128xf32, #tpu.memory_space<vmem>>, vector<8x128xf32>
    tpu.vector_store %arg5[%c0_10, %c0_11], %20 {strides = array<i32>} : memref<8x128xf32, #tpu.memory_space<vmem>>, vector<8x128xf32>,
    return
  }
  func.func @transform_0(%arg0: i32, %arg1: i32) -> (i32, i32) {
    %c1_i32 = arith.constant 1 : i32
    %0 = arith.muli %arg0, %c1_i32 : i32
    %1 = arith.addi %0, %arg1 : i32
    %c0_i32 = arith.constant 0 : i32
    %2 = arith.minsi %1, %c0_i32 : i32
    %c0_i32_0 = arith.constant 0 : i32
    %c0_i32_1 = arith.constant 0 : i32
    return %2, %c0_i32_0 : i32, i32
  }
  func.func @transform_1(%arg0: i32, %arg1: i32) -> (i32, i32) {
    %c1_i32 = arith.constant 1 : i32
    %0 = arith.muli %arg0, %c1_i32 : i32
    %1 = arith.addi %0, %arg1 : i32
    %c0_i32 = arith.constant 0 : i32
    %2 = arith.minsi %1, %c0_i32 : i32
    %c0_i32_0 = arith.constant 0 : i32
    %c0_i32_1 = arith.constant 0 : i32
    return %2, %c0_i32_0 : i32, i32
  }
  func.func @transform_2(%arg0: i32, %arg1: i32) -> (i32, i32) {
    %c1_i32 = arith.constant 1 : i32
    %0 = arith.muli %arg0, %c1_i32 : i32
    %1 = arith.addi %0, %arg1 : i32
    %c0_i32 = arith.constant 0 : i32
    %2 = arith.minsi %1, %c0_i32 : i32
    %c0_i32_0 = arith.constant 0 : i32
    %c0_i32_1 = arith.constant 0 : i32
    return %2, %c0_i32_0 : i32, i32
  }
  func.func @transform_3(%arg0: i32, %arg1: i32) -> (i32, i32) {
    %c0_i32 = arith.constant 0 : i32
    %c0_i32_0 = arith.constant 0 : i32
    return %arg0, %c0_i32 : i32, i32
  }
}

</mosaic_0001>

<llo_original>
// kernel: tpu_custom_call.1
$region0: #{tpu_custom_call.1}
  #allocation0 [shape = 'u32[]', space=smem, size = 0x4, offset = 0x4, fixed_abs, tag = 'smem constant byte address 0x4 - core index']
  #allocation1 [shape = 'u32[144,128]{1,0:T(1,128)}', space=vmem, size = 0x12000, scoped, tag = 'internal scratch']
  %s0 = inlined_call_operand.hbm [shape: f32[16,128], index: 0, kind: input, shape index: {}]
  %s1 = inlined_call_operand.hbm [shape: f32[16,128], index: 1, kind: input, shape index: {}]
  %s2 = inlined_call_operand.hbm [shape: f32[16,128], index: 2, kind: input, shape index: {}]
  %s3 = inlined_call_operand.hbm [shape: f32[8,128], index: 3, kind: output, shape index: {}]
  %s4 = sld [smem:[#allocation0]]
  $region38: #{tpu_custom_call.1} parent=0
    _
  %s6 = ssub.s32 1, %s4
  %s7 = scalar_select 0, %s6, %s4
  $region1: #{tpu_custom_call.1} parent=0
    #allocation2 [shape = 'u8[8192]{0}', space=vmem, size = 0x2000, scoped, tag = 'input window, operand 0, single buffered']
    #allocation3 [shape = 's32[1]{0}', space=sflag, size = 0x4, scoped, tag = 'scoped memory for tpu_custom_call.1']
    #allocation4 [shape = 's32[1]{0}', space=sflag, size = 0x4, scoped, tag = 'scoped memory for tpu_custom_call.1']
    #allocation5 [shape = 'u8[8192]{0}', space=vmem, size = 0x2000, scoped, tag = 'input window, operand 1, single buffered']
    #allocation6 [shape = 's32[1]{0}', space=sflag, size = 0x4, scoped, tag = 'scoped memory for tpu_custom_call.1']
    #allocation7 [shape = 'u8[8192]{0}', space=vmem, size = 0x2000, scoped, tag = 'input window, operand 2, single buffered']
    #allocation8 [shape = 'u8[4096]{0}', space=vmem, size = 0x1000, scoped, tag = 'output window, operand 0, single buffered']
    %8 = vsyncpa [#allocation3], 0
    %9 = vsyncpa [#allocation6], 0
    %10 = vsyncpa [#allocation4], 0
    // Predicated region
    $region2: #{tpu_custom_call.1} parent=1 // pred_check
      _
    $region3: #{tpu_custom_call.1} parent=1 // pred_check_branch
      %12 = sbr.rel (0) target = $region5
    $region4: #{tpu_custom_call.1} parent=1 // pred_region
      %s13 = sadd.s32 0, 0
      %p14 = scmp.lt.s32.totalorder %s13, 0
      %s15 = scalar_select %p14, %s13, 0
      %s16 = smul.u32 2, %s15
      %s18 = ssub.s32 256, 256
      %19 = vsyncadd [#allocation3], %s18
      %s20 = smul.addr %s16, 128
      %s21 = scalar_lea.hbm %s0, %s20
      %s22 = sshll.u32 [#allocation2], 4
      %s23 = int_to_ptr.vmem [resolvable:$true] %s22
      %28 = dma.hbm_to_vmem [thread:$0]  %s21, 256, %s23, [#allocation3], 128, 128, 8
    $region5: #{tpu_custom_call.1} parent=1 // pred_fallthru
      _
    // Predicated region
    $region6: #{tpu_custom_call.1} parent=1 // pred_check
      _
    $region7: #{tpu_custom_call.1} parent=1 // pred_check_branch
      %30 = sbr.rel (0) target = $region9
    $region8: #{tpu_custom_call.1} parent=1 // pred_region
      %s31 = sadd.s32 0, 0
      %p32 = scmp.lt.s32.totalorder %s31, 0
      %s33 = scalar_select %p32, %s31, 0
      %s34 = smul.u32 2, %s33
      %s36 = ssub.s32 256, 256
      %37 = vsyncadd [#allocation6], %s36
      %s38 = smul.addr %s34, 128
      %s39 = scalar_lea.hbm %s1, %s38
      %s40 = sshll.u32 [#allocation5], 4
      %s41 = int_to_ptr.vmem [resolvable:$true] %s40
      %46 = dma.hbm_to_vmem [thread:$0]  %s39, 256, %s41, [#allocation6], 128, 128, 8
    $region9: #{tpu_custom_call.1} parent=1 // pred_fallthru
      _
    // Predicated region
    $region10: #{tpu_custom_call.1} parent=1 // pred_check
      _
    $region11: #{tpu_custom_call.1} parent=1 // pred_check_branch
      %48 = sbr.rel (0) target = $region13
    $region12: #{tpu_custom_call.1} parent=1 // pred_region
      %s49 = sadd.s32 0, 0
      %p50 = scmp.lt.s32.totalorder %s49, 0
      %s51 = scalar_select %p50, %s49, 0
      %s52 = smul.u32 2, %s51
      %s54 = ssub.s32 256, 256
      %55 = vsyncadd [#allocation6], %s54
      %s56 = smul.addr %s52, 128
      %s57 = scalar_lea.hbm %s2, %s56
      %s58 = sshll.u32 [#allocation7], 4
      %s59 = int_to_ptr.vmem [resolvable:$true] %s58
      %64 = dma.hbm_to_vmem [thread:$0]  %s57, 256, %s59, [#allocation6], 128, 128, 8
    $region13: #{tpu_custom_call.1} parent=1 // pred_fallthru
      _
    // Predicated region
    $region14: #{tpu_custom_call.1} parent=1 // pred_check
      _
    $region15: #{tpu_custom_call.1} parent=1 // pred_check_branch
      %66 = sbr.rel (0) target = $region17
    $region16: #{tpu_custom_call.1} parent=1 // pred_region
      %67 = dma.done [#allocation3], 256
    $region17: #{tpu_custom_call.1} parent=1 // pred_fallthru
      _
    // Predicated region
    $region18: #{tpu_custom_call.1} parent=1 // pred_check
      _
    $region19: #{tpu_custom_call.1} parent=1 // pred_check_branch
      %69 = sbr.rel (0) target = $region21
    $region20: #{tpu_custom_call.1} parent=1 // pred_region
      %70 = dma.done [#allocation6], 256
    $region21: #{tpu_custom_call.1} parent=1 // pred_fallthru
      _
    // Predicated region
    $region22: #{tpu_custom_call.1} parent=1 // pred_check
      _
    $region23: #{tpu_custom_call.1} parent=1 // pred_check_branch
      %72 = sbr.rel (0) target = $region25
    $region24: #{tpu_custom_call.1} parent=1 // pred_region
      %73 = dma.done [#allocation6], 256
    $region25: #{tpu_custom_call.1} parent=1 // pred_fallthru
      _
    %s74 = sadd.s32 0, 0
    %p75 = scmp.lt.s32.totalorder %s74, 0
    %s76 = scalar_select %p75, %s74, 0
    %s77 = smul.u32 2, %s76
    %s78 = sadd.s32 0, 0
    %p79 = scmp.lt.s32.totalorder %s78, 0
    %s80 = scalar_select %p79, %s78, 0
    %s81 = smul.u32 2, %s80
    %s82 = sadd.s32 0, 0
    %p83 = scmp.lt.s32.totalorder %s82, 0
    %s84 = scalar_select %p83, %s82, 0
    %s85 = smul.u32 2, %s84
    %p86 = scmp.eq.s32.totalorder 0, 0
    // Predicated region
    $region26: #{tpu_custom_call.1} parent=1 // pred_check
      %p87 = pneg %p86
    $region27: #{tpu_custom_call.1} parent=1 // pred_check_branch
      %89 = sbr.rel (%p87) target = $region29
    $region28: #{tpu_custom_call.1} parent=1 // pred_region
      %90 = vst [vmem:[#allocation8] sm:$0xff] 0.0
    $region29: #{tpu_custom_call.1} parent=1 // pred_fallthru
      _
    %v91 = vld [vmem:[#allocation2] sm:$0xff]
    %v92 = vld [vmem:[#allocation2 + $0x8] sm:$0xff]
    %v93 = vld [vmem:[#allocation5] sm:$0xff]
    %v94 = vld [vmem:[#allocation5 + $0x8] sm:$0xff]
    %v95 = vld [vmem:[#allocation7] sm:$0xff]
    %v96 = vld [vmem:[#allocation7 + $0x8] sm:$0xff]
    %v97 = vmax.f32 %v91, 0.0
    %v98 = vmax.f32 %v92, 0.0
    %v99 = vmul.f32 %v91, %v93
    %v100 = vmul.f32 %v92, %v94
    %v101 = vsub.f32 %v97, %v99
    %v102 = vsub.f32 %v98, %v100
    %v103 = vand.u32 2147483647, %v91
    %v104 = vand.u32 2147483647, %v92
    %v105 = vsub.f32 0.0, %v103
    %v106 = vsub.f32 0.0, %v104
    %v107 = vmul.f32 %v105, 1.442695
    %v108 = vpow.pop %v107
    %v109 = vmul.f32 %v106, 1.442695
    %v110 = vpow.pop %v109
    %v111 = vadd.f32 %v108, 1.0
    %v112 = vlog2.pop %v111
    %v113 = vmul.f32 %v112, 0.6931472
    %v114 = vmul.f32 -0.5, %v108
    %v115 = vadd.f32 %v114, 1.0
    %v116 = vmul.f32 %v115, %v108
    %v117 = vand.u32 2147483647, %v108
    %vm118 = vcmp.lt.f32.partialorder %v117, 0.0004427343
    %v119 = vsel %vm118, %v116, %v113
    %v120 = vadd.f32 %v110, 1.0
    %v121 = vlog2.pop %v120
    %v122 = vmul.f32 %v121, 0.6931472
    %v123 = vmul.f32 -0.5, %v110
    %v124 = vadd.f32 %v123, 1.0
    %v125 = vmul.f32 %v124, %v110
    %v126 = vand.u32 2147483647, %v110
    %vm127 = vcmp.lt.f32.partialorder %v126, 0.0004427343
    %v128 = vsel %vm127, %v125, %v122
    %v129 = vadd.f32 %v101, %v119
    %v130 = vadd.f32 %v102, %v128
    %v131 = vmul.f32 %v129, %v95
    %v132 = vmul.f32 %v130, %v96
    %v133 = vld [vmem:[#allocation8] sm:$0xff]
    %v134 = vadd.f32 %v131, %v132
    %v135 = vadd.f32 %v133, %v134
    %136 = vst [vmem:[#allocation8] sm:$0xff] %v135
    // Predicated region
    $region30: #{tpu_custom_call.1} parent=1 // pred_check
      _
    $region31: #{tpu_custom_call.1} parent=1 // pred_check_branch
      %138 = sbr.rel (0) target = $region33
    $region32: #{tpu_custom_call.1} parent=1 // pred_region
      %s140 = ssub.s32 128, 128
      %141 = vsyncadd [#allocation4], %s140
      %s143 = sshll.u32 [#allocation8], 4
      %s144 = int_to_ptr.vmem [resolvable:$true] %s143
      %146 = dma.vmem_to_hbm [thread:$0]  %s144, 128, %s3, [#allocation4]
    $region33: #{tpu_custom_call.1} parent=1 // pred_fallthru
      _
    // Predicated region
    $region34: #{tpu_custom_call.1} parent=1 // pred_check
      _
    $region35: #{tpu_custom_call.1} parent=1 // pred_check_branch
      %148 = sbr.rel (0) target = $region37
    $region36: #{tpu_custom_call.1} parent=1 // pred_region
      %149 = dma.done [#allocation4], 128
    $region37: #{tpu_custom_call.1} parent=1 // pred_fallthru
      _
    %150 = vsyncpa [#allocation3], 1
    %151 = vsyncpa [#allocation6], 1
    %152 = vsyncpa [#allocation4], 1

</llo_original>
